<compile_context>
chip_gen: v7x
topology: tpu7x:2x2x1
jax: 0.10.0
libtpu: 0.0.40
codegen_flags: <defaults>
</compile_context>

<pallas_src>
import functools

import jax
import jax.numpy as jnp
from jax.experimental import pallas as pl
from jax.experimental.pallas import tpu as pltpu


K_PAD = 128    # lane-padded feature width used for every layer
OUT_DIM = 10   # logical width of the final Linear


def small_mlp_kernel(x_ref, w_ref, o_ref):
    """Fused 5x (Linear -> ReLU) + masked LogSoftmax, all lane-padded to 128.

    x_ref: (B, 128) f32      activations, zero-padded past the real feature dim
    w_ref: (L, 128, 128) bf16 pre-packed, zero-padded weights in (in, out) layout
    o_ref: (B, 128) f32      padded output; only [:, :OUT_DIM] is meaningful
    """
    h = x_ref[...]                                     # f32 (B, 128)
    for i in range(w_ref.shape[0]):                    # static, unrolled
        # bf16 operands into the MXU, f32 accumulation out of it.
        h = jnp.dot(h.astype(jnp.bfloat16), w_ref[i],
                    preferred_element_type=jnp.float32)
        h = jnp.maximum(h, 0.0)                        # ReLU in f32 (VPU)

    # Numerically-stable LogSoftmax over the first OUT_DIM lanes only
    # (padded lanes hold zeros after ReLU and must not enter the reduction).
    lane = jax.lax.broadcasted_iota(jnp.int32, h.shape, 1)
    valid = lane < OUT_DIM
    m = jnp.max(jnp.where(valid, h, -jnp.inf), axis=1, keepdims=True)
    e = jnp.where(valid, jnp.exp(h - m), 0.0)
    lse = jnp.log(jnp.sum(e, axis=1, keepdims=True)) + m
    o_ref[...] = (h - lse).astype(o_ref.dtype)         # lane-dense store


def pack_weights(weights, k_pad=K_PAD, n_pad=K_PAD):
    """Zero-pad each (in, out) weight to (k_pad, n_pad), cast bf16, stack once."""
    packed = []
    for w in weights:
        k, n = w.shape
        packed.append(jnp.pad(w.astype(jnp.bfloat16),
                              ((0, k_pad - k), (0, n_pad - n))))
    return jnp.stack(packed, axis=0)                   # (L, 128, 128) bf16


@functools.partial(jax.jit, static_argnames=("out_dim",))
def small_forward(x, w_packed, out_dim=OUT_DIM):
    """x: (B, F) f32; w_packed: (L, 128, 128) bf16 from pack_weights()."""
    B, F = x.shape
    L, K, N = w_packed.shape
    b_pad = max(8, -(-B // 8) * 8)                     # sublane-align batch
    x_p = jnp.zeros((b_pad, K), dtype=jnp.float32).at[:B, :F].set(x)

    def full(shape):
        return pl.BlockSpec(shape, lambda: (0,) * len(shape),
                            memory_space=pltpu.MemorySpace.VMEM)

    cost = pl.CostEstimate(
        flops=2 * b_pad * K * N * L,
        transcendentals=b_pad * (N + 1),
        bytes_accessed=x_p.size * 4 + w_packed.size * 2 + b_pad * N * 4,
    )

    out = pl.pallas_call(
        small_mlp_kernel,
        out_shape=jax.ShapeDtypeStruct((b_pad, N), jnp.float32),
        in_specs=[full(x_p.shape), full(w_packed.shape)],
        out_specs=full((b_pad, N)),
        cost_estimate=cost,
    )(x_p, w_packed)
    return out[:B, :out_dim]


def make_weights(coarse_size=8 * 8, l=(32, 32, 16, 16), seed=0):
    """Deterministic init matching nn.Linear(bias=False) shapes of `small`.

    PyTorch stores weight as (out, in); we build (in, out) (i.e. W^T) so the
    kernel computes x @ W^T directly.  Note: like the original module, this
    assumes coarse_size // 2 == l[0].
    """
    dims = [(coarse_size, coarse_size // 2)]
    for i in range(len(l) - 1):
        dims.append((l[i], l[i + 1]))
    dims.append((l[-1], 10))

    key = jax.random.PRNGKey(seed)
    weights = []
    for (fan_in, fan_out) in dims:
        key, sub = jax.random.split(key)
        bound = 1.0 / jnp.sqrt(fan_in)  # PyTorch default uniform bound
        w = jax.random.uniform(sub, (fan_in, fan_out),
                               minval=-bound, maxval=bound,
                               dtype=jnp.float32)
        weights.append(w)
    return weights


def reference_forward(x, weights):
    """Pure-JAX reference mirroring the kernel's bf16-MXU / f32-accumulate math."""
    h = x
    for w in weights:
        h = jnp.maximum(
            jnp.dot(h.astype(jnp.bfloat16), w.astype(jnp.bfloat16),
                    preferred_element_type=jnp.float32),
            0.0)
    return jax.nn.log_softmax(h, axis=1)


if __name__ == "__main__":
    coarse_size = 8 * 8
    B = 8

    key = jax.random.PRNGKey(0)
    x = jax.random.normal(key, (B, coarse_size), dtype=jnp.float32)
    weights = make_weights(coarse_size=coarse_size, seed=0)
    w_packed = pack_weights(weights)   # packed + bf16-cast once, reused per call

    out = small_forward(x, w_packed)
    out = jax.block_until_ready(out)

    ref = reference_forward(x, weights)
    assert out.shape == (B, 10)
    assert jnp.allclose(out, ref, atol=1e-4, rtol=1e-4), \
        float(jnp.max(jnp.abs(out - ref)))

    print("KERNEL_OK")
</pallas_src>

<mosaic_0001>
module attributes {stable_mosaic.version = 11 : i64} {
  func.func @small_mlp_kernel(%arg0: memref<8x128xf32, #tpu.memory_space<vmem>>, %arg1: memref<5x128x128xbf16, #tpu.memory_space<vmem>>, %arg2: memref<8x128xf32, #tpu.memory_space<vmem>>) attributes {dimension_semantics = [], scalar_prefetch = 0 : i64, scratch_operands = 0 : i64, tpu.core_type = #tpu.core_type<tc>} {
    %c0 = arith.constant 0 : index
    %c0_0 = arith.constant 0 : index
    %0 = vector.load %arg0[%c0, %c0_0] : memref<8x128xf32, #tpu.memory_space<vmem>>, vector<8x128xf32>
    %1 = arith.truncf %0 : vector<8x128xf32> to vector<8x128xbf16>
    %c0_1 = arith.constant 0 : index
    %c0_2 = arith.constant 0 : index
    %c0_3 = arith.constant 0 : index
    %2 = vector.load %arg1[%c0_1, %c0_2, %c0_3] : memref<5x128x128xbf16, #tpu.memory_space<vmem>>, vector<1x128x128xbf16>
    %3 = vector.shape_cast %2 : vector<1x128x128xbf16> to vector<128x128xbf16>
    %cst = arith.constant dense<0.000000e+00> : vector<8x128xf32>
    %4 = tpu.matmul %1, %3, %cst {dimension_numbers = #tpu.dot_dimension_numbers<[1], [0], [0], [1], [0, 0, 1, 1], [], []>} : vector<8x128xbf16>, vector<128x128xbf16>, vector<8x128xf32> -> vector<8x128xf32>
    %cst_4 = arith.constant 0.000000e+00 : f32
    %5 = vector.broadcast %cst_4 : f32 to vector<8x128xf32>
    %6 = arith.maximumf %4, %5 : vector<8x128xf32>
    %7 = arith.truncf %6 : vector<8x128xf32> to vector<8x128xbf16>
    %c1 = arith.constant 1 : index
    %c0_5 = arith.constant 0 : index
    %c0_6 = arith.constant 0 : index
    %8 = vector.load %arg1[%c1, %c0_5, %c0_6] : memref<5x128x128xbf16, #tpu.memory_space<vmem>>, vector<1x128x128xbf16>
    %9 = vector.shape_cast %8 : vector<1x128x128xbf16> to vector<128x128xbf16>
    %cst_7 = arith.constant dense<0.000000e+00> : vector<8x128xf32>
    %10 = tpu.matmul %7, %9, %cst_7 {dimension_numbers = #tpu.dot_dimension_numbers<[1], [0], [0], [1], [0, 0, 1, 1], [], []>} : vector<8x128xbf16>, vector<128x128xbf16>, vector<8x128xf32> -> vector<8x128xf32>
    %cst_8 = arith.constant 0.000000e+00 : f32
    %11 = vector.broadcast %cst_8 : f32 to vector<8x128xf32>
    %12 = arith.maximumf %10, %11 : vector<8x128xf32>
    %13 = arith.truncf %12 : vector<8x128xf32> to vector<8x128xbf16>
    %c2 = arith.constant 2 : index
    %c0_9 = arith.constant 0 : index
    %c0_10 = arith.constant 0 : index
    %14 = vector.load %arg1[%c2, %c0_9, %c0_10] : memref<5x128x128xbf16, #tpu.memory_space<vmem>>, vector<1x128x128xbf16>
    %15 = vector.shape_cast %14 : vector<1x128x128xbf16> to vector<128x128xbf16>
    %cst_11 = arith.constant dense<0.000000e+00> : vector<8x128xf32>
    %16 = tpu.matmul %13, %15, %cst_11 {dimension_numbers = #tpu.dot_dimension_numbers<[1], [0], [0], [1], [0, 0, 1, 1], [], []>} : vector<8x128xbf16>, vector<128x128xbf16>, vector<8x128xf32> -> vector<8x128xf32>
    %cst_12 = arith.constant 0.000000e+00 : f32
    %17 = vector.broadcast %cst_12 : f32 to vector<8x128xf32>
    %18 = arith.maximumf %16, %17 : vector<8x128xf32>
    %19 = arith.truncf %18 : vector<8x128xf32> to vector<8x128xbf16>
    %c3 = arith.constant 3 : index
    %c0_13 = arith.constant 0 : index
    %c0_14 = arith.constant 0 : index
    %20 = vector.load %arg1[%c3, %c0_13, %c0_14] : memref<5x128x128xbf16, #tpu.memory_space<vmem>>, vector<1x128x128xbf16>
    %21 = vector.shape_cast %20 : vector<1x128x128xbf16> to vector<128x128xbf16>
    %cst_15 = arith.constant dense<0.000000e+00> : vector<8x128xf32>
    %22 = tpu.matmul %19, %21, %cst_15 {dimension_numbers = #tpu.dot_dimension_numbers<[1], [0], [0], [1], [0, 0, 1, 1], [], []>} : vector<8x128xbf16>, vector<128x128xbf16>, vector<8x128xf32> -> vector<8x128xf32>
    %cst_16 = arith.constant 0.000000e+00 : f32
    %23 = vector.broadcast %cst_16 : f32 to vector<8x128xf32>
    %24 = arith.maximumf %22, %23 : vector<8x128xf32>
    %25 = arith.truncf %24 : vector<8x128xf32> to vector<8x128xbf16>
    %c4 = arith.constant 4 : index
    %c0_17 = arith.constant 0 : index
    %c0_18 = arith.constant 0 : index
    %26 = vector.load %arg1[%c4, %c0_17, %c0_18] : memref<5x128x128xbf16, #tpu.memory_space<vmem>>, vector<1x128x128xbf16>
    %27 = vector.shape_cast %26 : vector<1x128x128xbf16> to vector<128x128xbf16>
    %cst_19 = arith.constant dense<0.000000e+00> : vector<8x128xf32>
    %28 = tpu.matmul %25, %27, %cst_19 {dimension_numbers = #tpu.dot_dimension_numbers<[1], [0], [0], [1], [0, 0, 1, 1], [], []>} : vector<8x128xbf16>, vector<128x128xbf16>, vector<8x128xf32> -> vector<8x128xf32>
    %cst_20 = arith.constant 0.000000e+00 : f32
    %29 = vector.broadcast %cst_20 : f32 to vector<8x128xf32>
    %30 = arith.maximumf %28, %29 : vector<8x128xf32>
    %31 = tpu.iota {dimensions = array<i32: 1>} : vector<8x128xi32>
    %c10_i32 = arith.constant 10 : i32
    %32 = vector.broadcast %c10_i32 : i32 to vector<8x128xi32>
    %33 = arith.cmpi slt, %31, %32 : vector<8x128xi32>
    %cst_21 = arith.constant 0xFF800000 : f32
    %34 = vector.broadcast %cst_21 : f32 to vector<8x128xf32>
    %35 = arith.select %33, %30, %34 : vector<8x128xi1>, vector<8x128xf32>
    %cst_22 = arith.constant dense<0xFF800000> : vector<8xf32>
    %36 = vector.multi_reduction <maximumf>, %35, %cst_22 [1] : vector<8x128xf32> to vector<8xf32>
    %37 = vector.shape_cast %36 : vector<8xf32> to vector<8x1xf32>
    %38 = vector.broadcast %37 : vector<8x1xf32> to vector<8x128xf32>
    %39 = arith.subf %30, %38 : vector<8x128xf32>
    %40 = math.exp %39 : vector<8x128xf32>
    %cst_23 = arith.constant 0.000000e+00 : f32
    %41 = vector.broadcast %cst_23 : f32 to vector<8x128xf32>
    %42 = arith.select %33, %40, %41 : vector<8x128xi1>, vector<8x128xf32>
    %cst_24 = arith.constant dense<0.000000e+00> : vector<8xf32>
    %43 = vector.multi_reduction <add>, %42, %cst_24 [1] : vector<8x128xf32> to vector<8xf32>
    %44 = vector.shape_cast %43 : vector<8xf32> to vector<8x1xf32>
    %45 = math.log %44 : vector<8x1xf32>
    %46 = arith.addf %45, %37 : vector<8x1xf32>
    %47 = vector.broadcast %46 : vector<8x1xf32> to vector<8x128xf32>
    %48 = arith.subf %30, %47 : vector<8x128xf32>
    %c0_25 = arith.constant 0 : index
    %c0_26 = arith.constant 0 : index
    %49 = vector.load %arg2[%c0_25, %c0_26] : memref<8x128xf32, #tpu.memory_space<vmem>>, vector<8x128xf32>
    tpu.vector_store %arg2[%c0_25, %c0_26], %48 {strides = array<i32>} : memref<8x128xf32, #tpu.memory_space<vmem>>, vector<8x128xf32>,
    return
  }
}

</mosaic_0001>

<llo_original>
// kernel: small_forward.1
$region0: #{small_forward.1}
  #allocation0 [shape = 'u32[]', space=smem, size = 0x4, offset = 0x4, fixed_abs, tag = 'smem constant byte address 0x4 - core index']
  #allocation1 [shape = 'u32[144,128]{1,0:T(1,128)}', space=vmem, size = 0x12000, scoped, tag = 'internal scratch']
  %s0 = inlined_call_operand.vmem [shape: f32[8,128], index: 0, kind: input, shape index: {}]
  %s1 = inlined_call_operand.hbm [shape: bf16[5,128,128], index: 1, kind: input, shape index: {}]
  %s2 = inlined_call_operand.hbm [shape: f32[8,128], index: 2, kind: output, shape index: {}]
  %s3 = sld [smem:[#allocation0]]
  $region22: #{small_forward.1} parent=0
    _
  %s5 = ssub.s32 1, %s3
  %s6 = scalar_select 0, %s5, %s3
  $region1: #{small_forward.1} parent=0
    #allocation2 [shape = 'u8[163840]{0}', space=vmem, size = 0x28000, scoped, tag = 'input window, operand 1, single buffered']
    #allocation3 [shape = 's32[1]{0}', space=sflag, size = 0x4, scoped, tag = 'scoped memory for small_forward.1']
    #allocation4 [shape = 's32[1]{0}', space=sflag, size = 0x4, scoped, tag = 'scoped memory for small_forward.1']
    #allocation5 [shape = 'u8[4096]{0}', space=vmem, size = 0x1000, scoped, tag = 'output window, operand 0, single buffered']
    %7 = vsyncpa [#allocation3], 0
    %8 = vsyncpa [#allocation4], 0
    // Predicated region
    $region2: #{small_forward.1} parent=1 // pred_check
      _
    $region3: #{small_forward.1} parent=1 // pred_check_branch
      %10 = sbr.rel (0) target = $region5
    $region4: #{small_forward.1} parent=1 // pred_region
      _
    $region5: #{small_forward.1} parent=1 // pred_fallthru
      _
    // Predicated region
    $region6: #{small_forward.1} parent=1 // pred_check
      _
    $region7: #{small_forward.1} parent=1 // pred_check_branch
      %12 = sbr.rel (0) target = $region9
    $region8: #{small_forward.1} parent=1 // pred_region
      %s14 = ssub.s32 5120, 5120
      %15 = vsyncadd [#allocation3], %s14
      %s16 = sshll.u32 [#allocation2], 4
      %s17 = int_to_ptr.vmem [resolvable:$true] %s16
      %22 = dma.hbm_to_vmem [thread:$0]  %s1, 5120, %s17, [#allocation3], 64, 64, 4
    $region9: #{small_forward.1} parent=1 // pred_fallthru
      _
    // Predicated region
    $region10: #{small_forward.1} parent=1 // pred_check
      _
    $region11: #{small_forward.1} parent=1 // pred_check_branch
      %24 = sbr.rel (0) target = $region13
    $region12: #{small_forward.1} parent=1 // pred_region
      %25 = dma.done [#allocation3], 5120
    $region13: #{small_forward.1} parent=1 // pred_fallthru
      _
    %v27 = vld [vmem:[%s0] sm:$0xff]
    %v28 = vpack.c.bf16 %v27, %v27
    %v29 = vld [vmem:[#allocation2] sm:$0xf]
    %v30 = vld [vmem:[#allocation2 + $0x4] sm:$0xf]
    %v31 = vld [vmem:[#allocation2 + $0x8] sm:$0xf]
    %v32 = vld [vmem:[#allocation2 + $0xc] sm:$0xf]
    %v33 = vld [vmem:[#allocation2 + $0x10] sm:$0xf]
    %v34 = vld [vmem:[#allocation2 + $0x14] sm:$0xf]
    %v35 = vld [vmem:[#allocation2 + $0x18] sm:$0xf]
    %v36 = vld [vmem:[#allocation2 + $0x1c] sm:$0xf]
    %v37 = vld [vmem:[#allocation2 + $0x20] sm:$0xf]
    %v38 = vld [vmem:[#allocation2 + $0x24] sm:$0xf]
    %v39 = vld [vmem:[#allocation2 + $0x28] sm:$0xf]
    %v40 = vld [vmem:[#allocation2 + $0x2c] sm:$0xf]
    %v41 = vld [vmem:[#allocation2 + $0x30] sm:$0xf]
    %v42 = vld [vmem:[#allocation2 + $0x34] sm:$0xf]
    %v43 = vld [vmem:[#allocation2 + $0x38] sm:$0xf]
    %v44 = vld [vmem:[#allocation2 + $0x3c] sm:$0xf]
    %v61 = vunpack.c.l.b16 %v29
    %v62 = vunpack.c.l.b16 %v30
    %v63 = vunpack.c.l.b16 %v31
    %v64 = vunpack.c.l.b16 %v32
    %v65 = vunpack.c.l.b16 %v33
    %v66 = vunpack.c.l.b16 %v34
    %v67 = vunpack.c.l.b16 %v35
    %v68 = vunpack.c.l.b16 %v36
    %v69 = vunpack.c.l.b16 %v37
    %v70 = vunpack.c.l.b16 %v38
    %v71 = vunpack.c.l.b16 %v39
    %v72 = vunpack.c.l.b16 %v40
    %v73 = vunpack.c.l.b16 %v41
    %v74 = vunpack.c.l.b16 %v42
    %v75 = vunpack.c.l.b16 %v43
    %v76 = vunpack.c.l.b16 %v44
    %v77 = vpack.c.b16 %v62, %v61
    %v78 = vpack.c.b16 %v64, %v63
    %v79 = vpack.c.b16 %v66, %v65
    %v80 = vpack.c.b16 %v68, %v67
    %v81 = vpack.c.b16 %v70, %v69
    %v82 = vpack.c.b16 %v72, %v71
    %v83 = vpack.c.b16 %v74, %v73
    %v84 = vpack.c.b16 %v76, %v75
    %93 = vmatprep.subr.bf16.mxu0 0
    %94 = vmatpush1.bf16.msra.mxu0 %v77
    %95 = vmatprep.subr.bf16.mxu0 0
    %96 = vmatpush1.bf16.msra.mxu0 %v78
    %97 = vmatprep.subr.bf16.mxu0 0
    %98 = vmatpush1.bf16.msra.mxu0 %v79
    %99 = vmatprep.subr.bf16.mxu0 0
    %100 = vmatpush1.bf16.msra.mxu0 %v80
    %101 = vmatprep.subr.bf16.mxu0 0
    %102 = vmatpush1.bf16.msra.mxu0 %v81
    %103 = vmatprep.subr.bf16.mxu0 0
    %104 = vmatpush1.bf16.msra.mxu0 %v82
    %105 = vmatprep.subr.bf16.mxu0 0
    %106 = vmatpush1.bf16.msra.mxu0 %v83
    %107 = vmatprep.subr.bf16.mxu0 0
    %108 = vmatpush1.bf16.msra.mxu0 %v84
    %109 = vmatprep.subr.bf16.mxu0 0
    %110 = vmatpush1.bf16.msra.mxu0 0
    %111 = vmatprep.subr.bf16.mxu0 0
    %112 = vmatpush1.bf16.msra.mxu0 0
    %113 = vmatprep.subr.bf16.mxu0 0
    %114 = vmatpush1.bf16.msra.mxu0 0
    %115 = vmatprep.subr.bf16.mxu0 0
    %116 = vmatpush1.bf16.msra.mxu0 0
    %117 = vmatprep.subr.bf16.mxu0 0
    %118 = vmatpush1.bf16.msra.mxu0 0
    %119 = vmatprep.subr.bf16.mxu0 0
    %120 = vmatpush1.bf16.msra.mxu0 0
    %121 = vmatprep.subr.bf16.mxu0 0
    %122 = vmatpush1.bf16.msra.mxu0 0
    %123 = vmatprep.subr.bf16.mxu0 0
    %124 = vmatpush1.bf16.msra.mxu0 0
    %125 = vmatprep.mubr.bf16.mxu0 0
    %126 = vmatmul.mubr.bf16.gmra.mrb[0].mxu0 %v28
    %v127 = vpop.f32.mrb[0].mxu0
    %v128 = vadd.f32 0.0, %v127
    %v129 = vpop.f32.mrb[0].mxu0
    %v130 = vpop.f32.mrb[0].mxu0
    %v131 = vpop.f32.mrb[0].mxu0
    %132 = vdwg.mxu0
    %v133 = vmax.f32 %v128, 0.0
    %v134 = vpack.c.bf16 %v133, %v133
    %s135 = scalar_lea.vmem [#allocation2], 64
    %v136 = vld [vmem:[%s135] sm:$0xf]
    %v137 = vld [vmem:[%s135 + $0x4] sm:$0xf]
    %v138 = vld [vmem:[%s135 + $0x8] sm:$0xf]
    %v139 = vld [vmem:[%s135 + $0xc] sm:$0xf]
    %v140 = vld [vmem:[%s135 + $0x10] sm:$0xf]
    %v141 = vld [vmem:[%s135 + $0x14] sm:$0xf]
    %v142 = vld [vmem:[%s135 + $0x18] sm:$0xf]
    %v143 = vld [vmem:[%s135 + $0x1c] sm:$0xf]
    %v144 = vld [vmem:[%s135 + $0x20] sm:$0xf]
    %v145 = vld [vmem:[%s135 + $0x24] sm:$0xf]
    %v146 = vld [vmem:[%s135 + $0x28] sm:$0xf]
    %v147 = vld [vmem:[%s135 + $0x2c] sm:$0xf]
    %v148 = vld [vmem:[%s135 + $0x30] sm:$0xf]
    %v149 = vld [vmem:[%s135 + $0x34] sm:$0xf]
    %v150 = vld [vmem:[%s135 + $0x38] sm:$0xf]
    %v151 = vld [vmem:[%s135 + $0x3c] sm:$0xf]
    %v168 = vunpack.c.l.b16 %v136
    %v169 = vunpack.c.l.b16 %v137
    %v170 = vunpack.c.l.b16 %v138
    %v171 = vunpack.c.l.b16 %v139
    %v172 = vunpack.c.l.b16 %v140
    %v173 = vunpack.c.l.b16 %v141
    %v174 = vunpack.c.l.b16 %v142
    %v175 = vunpack.c.l.b16 %v143
    %v176 = vunpack.c.l.b16 %v144
    %v177 = vunpack.c.l.b16 %v145
    %v178 = vunpack.c.l.b16 %v146
    %v179 = vunpack.c.l.b16 %v147
    %v180 = vunpack.c.l.b16 %v148
    %v181 = vunpack.c.l.b16 %v149
    %v182 = vunpack.c.l.b16 %v150
    %v183 = vunpack.c.l.b16 %v151
    %v184 = vpack.c.b16 %v169, %v168
    %v185 = vpack.c.b16 %v171, %v170
    %v186 = vpack.c.b16 %v173, %v172
    %v187 = vpack.c.b16 %v175, %v174
    %v188 = vpack.c.b16 %v177, %v176
    %v189 = vpack.c.b16 %v179, %v178
    %v190 = vpack.c.b16 %v181, %v180
    %v191 = vpack.c.b16 %v183, %v182
    %200 = vmatprep.subr.bf16.mxu0 0
    %201 = vmatpush1.bf16.msra.mxu0 %v184
    %202 = vmatprep.subr.bf16.mxu0 0
    %203 = vmatpush1.bf16.msra.mxu0 %v185
    %204 = vmatprep.subr.bf16.mxu0 0
    %205 = vmatpush1.bf16.msra.mxu0 %v186
    %206 = vmatprep.subr.bf16.mxu0 0
    %207 = vmatpush1.bf16.msra.mxu0 %v187
    %208 = vmatprep.subr.bf16.mxu0 0
    %209 = vmatpush1.bf16.msra.mxu0 %v188
    %210 = vmatprep.subr.bf16.mxu0 0
    %211 = vmatpush1.bf16.msra.mxu0 %v189
    %212 = vmatprep.subr.bf16.mxu0 0
    %213 = vmatpush1.bf16.msra.mxu0 %v190
    %214 = vmatprep.subr.bf16.mxu0 0
    %215 = vmatpush1.bf16.msra.mxu0 %v191
    %216 = vmatprep.subr.bf16.mxu0 0
    %217 = vmatpush1.bf16.msra.mxu0 0
    %218 = vmatprep.subr.bf16.mxu0 0
    %219 = vmatpush1.bf16.msra.mxu0 0
    %220 = vmatprep.subr.bf16.mxu0 0
    %221 = vmatpush1.bf16.msra.mxu0 0
    %222 = vmatprep.subr.bf16.mxu0 0
    %223 = vmatpush1.bf16.msra.mxu0 0
    %224 = vmatprep.subr.bf16.mxu0 0
    %225 = vmatpush1.bf16.msra.mxu0 0
    %226 = vmatprep.subr.bf16.mxu0 0
    %227 = vmatpush1.bf16.msra.mxu0 0
    %228 = vmatprep.subr.bf16.mxu0 0
    %229 = vmatpush1.bf16.msra.mxu0 0
    %230 = vmatprep.subr.bf16.mxu0 0
    %231 = vmatpush1.bf16.msra.mxu0 0
    %232 = vmatprep.mubr.bf16.mxu0 0
    %233 = vmatmul.mubr.bf16.gmra.mrb[0].mxu0 %v134
    %v234 = vpop.f32.mrb[0].mxu0
    %v235 = vadd.f32 0.0, %v234
    %v236 = vpop.f32.mrb[0].mxu0
    %v237 = vpop.f32.mrb[0].mxu0
    %v238 = vpop.f32.mrb[0].mxu0
    %239 = vdwg.mxu0
    %v240 = vmax.f32 %v235, 0.0
    %v241 = vpack.c.bf16 %v240, %v240
    %s242 = scalar_lea.vmem [#allocation2], 128
    %v243 = vld [vmem:[%s242] sm:$0xf]
    %v244 = vld [vmem:[%s242 + $0x4] sm:$0xf]
    %v245 = vld [vmem:[%s242 + $0x8] sm:$0xf]
    %v246 = vld [vmem:[%s242 + $0xc] sm:$0xf]
    %v247 = vld [vmem:[%s242 + $0x10] sm:$0xf]
    %v248 = vld [vmem:[%s242 + $0x14] sm:$0xf]
    %v249 = vld [vmem:[%s242 + $0x18] sm:$0xf]
    %v250 = vld [vmem:[%s242 + $0x1c] sm:$0xf]
    %v251 = vld [vmem:[%s242 + $0x20] sm:$0xf]
    %v252 = vld [vmem:[%s242 + $0x24] sm:$0xf]
    %v253 = vld [vmem:[%s242 + $0x28] sm:$0xf]
    %v254 = vld [vmem:[%s242 + $0x2c] sm:$0xf]
    %v255 = vld [vmem:[%s242 + $0x30] sm:$0xf]
    %v256 = vld [vmem:[%s242 + $0x34] sm:$0xf]
    %v257 = vld [vmem:[%s242 + $0x38] sm:$0xf]
    %v258 = vld [vmem:[%s242 + $0x3c] sm:$0xf]
    %v275 = vunpack.c.l.b16 %v243
    %v276 = vunpack.c.l.b16 %v244
    %v277 = vunpack.c.l.b16 %v245
    %v278 = vunpack.c.l.b16 %v246
    %v279 = vunpack.c.l.b16 %v247
    %v280 = vunpack.c.l.b16 %v248
    %v281 = vunpack.c.l.b16 %v249
    %v282 = vunpack.c.l.b16 %v250
    %v283 = vunpack.c.l.b16 %v251
    %v284 = vunpack.c.l.b16 %v252
    %v285 = vunpack.c.l.b16 %v253
    %v286 = vunpack.c.l.b16 %v254
    %v287 = vunpack.c.l.b16 %v255
    %v288 = vunpack.c.l.b16 %v256
    %v289 = vunpack.c.l.b16 %v257
    %v290 = vunpack.c.l.b16 %v258
    %v291 = vpack.c.b16 %v276, %v275
    %v292 = vpack.c.b16 %v278, %v277
    %v293 = vpack.c.b16 %v280, %v279
    %v294 = vpack.c.b16 %v282, %v281
    %v295 = vpack.c.b16 %v284, %v283
    %v296 = vpack.c.b16 %v286, %v285
    %v297 = vpack.c.b16 %v288, %v287
    %v298 = vpack.c.b16 %v290, %v289
    %307 = vmatprep.subr.bf16.mxu0 0
    %308 = vmatpush1.bf16.msra.mxu0 %v291
    %309 = vmatprep.subr.bf16.mxu0 0
    %310 = vmatpush1.bf16.msra.mxu0 %v292
    %311 = vmatprep.subr.bf16.mxu0 0
    %312 = vmatpush1.bf16.msra.mxu0 %v293
    %313 = vmatprep.subr.bf16.mxu0 0
    %314 = vmatpush1.bf16.msra.mxu0 %v294
    %315 = vmatprep.subr.bf16.mxu0 0
    %316 = vmatpush1.bf16.msra.mxu0 %v295
    %317 = vmatprep.subr.bf16.mxu0 0
    %318 = vmatpush1.bf16.msra.mxu0 %v296
    %319 = vmatprep.subr.bf16.mxu0 0
    %320 = vmatpush1.bf16.msra.mxu0 %v297
    %321 = vmatprep.subr.bf16.mxu0 0
    %322 = vmatpush1.bf16.msra.mxu0 %v298
    %323 = vmatprep.subr.bf16.mxu0 0
    %324 = vmatpush1.bf16.msra.mxu0 0
    %325 = vmatprep.subr.bf16.mxu0 0
    %326 = vmatpush1.bf16.msra.mxu0 0
    %327 = vmatprep.subr.bf16.mxu0 0
    %328 = vmatpush1.bf16.msra.mxu0 0
    %329 = vmatprep.subr.bf16.mxu0 0
    %330 = vmatpush1.bf16.msra.mxu0 0
    %331 = vmatprep.subr.bf16.mxu0 0
    %332 = vmatpush1.bf16.msra.mxu0 0
    %333 = vmatprep.subr.bf16.mxu0 0
    %334 = vmatpush1.bf16.msra.mxu0 0
    %335 = vmatprep.subr.bf16.mxu0 0
    %336 = vmatpush1.bf16.msra.mxu0 0
    %337 = vmatprep.subr.bf16.mxu0 0
    %338 = vmatpush1.bf16.msra.mxu0 0
    %339 = vmatprep.mubr.bf16.mxu0 0
    %340 = vmatmul.mubr.bf16.gmra.mrb[0].mxu0 %v241
    %v341 = vpop.f32.mrb[0].mxu0
    %v342 = vadd.f32 0.0, %v341
    %v343 = vpop.f32.mrb[0].mxu0
    %v344 = vpop.f32.mrb[0].mxu0
    %v345 = vpop.f32.mrb[0].mxu0
    %346 = vdwg.mxu0
    %v347 = vmax.f32 %v342, 0.0
    %v348 = vpack.c.bf16 %v347, %v347
    %s349 = scalar_lea.vmem [#allocation2], 192
    %v350 = vld [vmem:[%s349] sm:$0xf]
    %v351 = vld [vmem:[%s349 + $0x4] sm:$0xf]
    %v352 = vld [vmem:[%s349 + $0x8] sm:$0xf]
    %v353 = vld [vmem:[%s349 + $0xc] sm:$0xf]
    %v354 = vld [vmem:[%s349 + $0x10] sm:$0xf]
    %v355 = vld [vmem:[%s349 + $0x14] sm:$0xf]
    %v356 = vld [vmem:[%s349 + $0x18] sm:$0xf]
    %v357 = vld [vmem:[%s349 + $0x1c] sm:$0xf]
    %v358 = vld [vmem:[%s349 + $0x20] sm:$0xf]
    %v359 = vld [vmem:[%s349 + $0x24] sm:$0xf]
    %v360 = vld [vmem:[%s349 + $0x28] sm:$0xf]
    %v361 = vld [vmem:[%s349 + $0x2c] sm:$0xf]
    %v362 = vld [vmem:[%s349 + $0x30] sm:$0xf]
    %v363 = vld [vmem:[%s349 + $0x34] sm:$0xf]
    %v364 = vld [vmem:[%s349 + $0x38] sm:$0xf]
    %v365 = vld [vmem:[%s349 + $0x3c] sm:$0xf]
    %v382 = vunpack.c.l.b16 %v350
    %v383 = vunpack.c.l.b16 %v351
    %v384 = vunpack.c.l.b16 %v352
    %v385 = vunpack.c.l.b16 %v353
    %v386 = vunpack.c.l.b16 %v354
    %v387 = vunpack.c.l.b16 %v355
    %v388 = vunpack.c.l.b16 %v356
    %v389 = vunpack.c.l.b16 %v357
    %v390 = vunpack.c.l.b16 %v358
    %v391 = vunpack.c.l.b16 %v359
    %v392 = vunpack.c.l.b16 %v360
    %v393 = vunpack.c.l.b16 %v361
    %v394 = vunpack.c.l.b16 %v362
    %v395 = vunpack.c.l.b16 %v363
    %v396 = vunpack.c.l.b16 %v364
    %v397 = vunpack.c.l.b16 %v365
    %v398 = vpack.c.b16 %v383, %v382
    %v399 = vpack.c.b16 %v385, %v384
    %v400 = vpack.c.b16 %v387, %v386
    %v401 = vpack.c.b16 %v389, %v388
    %v402 = vpack.c.b16 %v391, %v390
    %v403 = vpack.c.b16 %v393, %v392
    %v404 = vpack.c.b16 %v395, %v394
    %v405 = vpack.c.b16 %v397, %v396
    %414 = vmatprep.subr.bf16.mxu0 0
    %415 = vmatpush1.bf16.msra.mxu0 %v398
    %416 = vmatprep.subr.bf16.mxu0 0
    %417 = vmatpush1.bf16.msra.mxu0 %v399
    %418 = vmatprep.subr.bf16.mxu0 0
    %419 = vmatpush1.bf16.msra.mxu0 %v400
    %420 = vmatprep.subr.bf16.mxu0 0
    %421 = vmatpush1.bf16.msra.mxu0 %v401
    %422 = vmatprep.subr.bf16.mxu0 0
    %423 = vmatpush1.bf16.msra.mxu0 %v402
    %424 = vmatprep.subr.bf16.mxu0 0
    %425 = vmatpush1.bf16.msra.mxu0 %v403
    %426 = vmatprep.subr.bf16.mxu0 0
    %427 = vmatpush1.bf16.msra.mxu0 %v404
    %428 = vmatprep.subr.bf16.mxu0 0
    %429 = vmatpush1.bf16.msra.mxu0 %v405
    %430 = vmatprep.subr.bf16.mxu0 0
    %431 = vmatpush1.bf16.msra.mxu0 0
    %432 = vmatprep.subr.bf16.mxu0 0
    %433 = vmatpush1.bf16.msra.mxu0 0
    %434 = vmatprep.subr.bf16.mxu0 0
    %435 = vmatpush1.bf16.msra.mxu0 0
    %436 = vmatprep.subr.bf16.mxu0 0
    %437 = vmatpush1.bf16.msra.mxu0 0
    %438 = vmatprep.subr.bf16.mxu0 0
    %439 = vmatpush1.bf16.msra.mxu0 0
    %440 = vmatprep.subr.bf16.mxu0 0
    %441 = vmatpush1.bf16.msra.mxu0 0
    %442 = vmatprep.subr.bf16.mxu0 0
    %443 = vmatpush1.bf16.msra.mxu0 0
    %444 = vmatprep.subr.bf16.mxu0 0
    %445 = vmatpush1.bf16.msra.mxu0 0
    %446 = vmatprep.mubr.bf16.mxu0 0
    %447 = vmatmul.mubr.bf16.gmra.mrb[0].mxu0 %v348
    %v448 = vpop.f32.mrb[0].mxu0
    %v449 = vadd.f32 0.0, %v448
    %v450 = vpop.f32.mrb[0].mxu0
    %v451 = vpop.f32.mrb[0].mxu0
    %v452 = vpop.f32.mrb[0].mxu0
    %453 = vdwg.mxu0
    %v454 = vmax.f32 %v449, 0.0
    %v455 = vpack.c.bf16 %v454, %v454
    %s456 = scalar_lea.vmem [#allocation2], 256
    %v457 = vld [vmem:[%s456] sm:$0xf]
    %v458 = vld [vmem:[%s456 + $0x4] sm:$0xf]
    %v459 = vld [vmem:[%s456 + $0x8] sm:$0xf]
    %v460 = vld [vmem:[%s456 + $0xc] sm:$0xf]
    %v461 = vld [vmem:[%s456 + $0x10] sm:$0xf]
    %v462 = vld [vmem:[%s456 + $0x14] sm:$0xf]
    %v463 = vld [vmem:[%s456 + $0x18] sm:$0xf]
    %v464 = vld [vmem:[%s456 + $0x1c] sm:$0xf]
    %v465 = vld [vmem:[%s456 + $0x20] sm:$0xf]
    %v466 = vld [vmem:[%s456 + $0x24] sm:$0xf]
    %v467 = vld [vmem:[%s456 + $0x28] sm:$0xf]
    %v468 = vld [vmem:[%s456 + $0x2c] sm:$0xf]
    %v469 = vld [vmem:[%s456 + $0x30] sm:$0xf]
    %v470 = vld [vmem:[%s456 + $0x34] sm:$0xf]
    %v471 = vld [vmem:[%s456 + $0x38] sm:$0xf]
    %v472 = vld [vmem:[%s456 + $0x3c] sm:$0xf]
    %v489 = vunpack.c.l.b16 %v457
    %v490 = vunpack.c.l.b16 %v458
    %v491 = vunpack.c.l.b16 %v459
    %v492 = vunpack.c.l.b16 %v460
    %v493 = vunpack.c.l.b16 %v461
    %v494 = vunpack.c.l.b16 %v462
    %v495 = vunpack.c.l.b16 %v463
    %v496 = vunpack.c.l.b16 %v464
    %v497 = vunpack.c.l.b16 %v465
    %v498 = vunpack.c.l.b16 %v466
    %v499 = vunpack.c.l.b16 %v467
    %v500 = vunpack.c.l.b16 %v468
    %v501 = vunpack.c.l.b16 %v469
    %v502 = vunpack.c.l.b16 %v470
    %v503 = vunpack.c.l.b16 %v471
    %v504 = vunpack.c.l.b16 %v472
    %v505 = vpack.c.b16 %v490, %v489
    %v506 = vpack.c.b16 %v492, %v491
    %v507 = vpack.c.b16 %v494, %v493
    %v508 = vpack.c.b16 %v496, %v495
    %v509 = vpack.c.b16 %v498, %v497
    %v510 = vpack.c.b16 %v500, %v499
    %v511 = vpack.c.b16 %v502, %v501
    %v512 = vpack.c.b16 %v504, %v503
    %521 = vmatprep.subr.bf16.mxu0 0
    %522 = vmatpush1.bf16.msra.mxu0 %v505
    %523 = vmatprep.subr.bf16.mxu0 0
    %524 = vmatpush1.bf16.msra.mxu0 %v506
    %525 = vmatprep.subr.bf16.mxu0 0
    %526 = vmatpush1.bf16.msra.mxu0 %v507
    %527 = vmatprep.subr.bf16.mxu0 0
    %528 = vmatpush1.bf16.msra.mxu0 %v508
    %529 = vmatprep.subr.bf16.mxu0 0
    %530 = vmatpush1.bf16.msra.mxu0 %v509
    %531 = vmatprep.subr.bf16.mxu0 0
    %532 = vmatpush1.bf16.msra.mxu0 %v510
    %533 = vmatprep.subr.bf16.mxu0 0
    %534 = vmatpush1.bf16.msra.mxu0 %v511
    %535 = vmatprep.subr.bf16.mxu0 0
    %536 = vmatpush1.bf16.msra.mxu0 %v512
    %537 = vmatprep.subr.bf16.mxu0 0
    %538 = vmatpush1.bf16.msra.mxu0 0
    %539 = vmatprep.subr.bf16.mxu0 0
    %540 = vmatpush1.bf16.msra.mxu0 0
    %541 = vmatprep.subr.bf16.mxu0 0
    %542 = vmatpush1.bf16.msra.mxu0 0
    %543 = vmatprep.subr.bf16.mxu0 0
    %544 = vmatpush1.bf16.msra.mxu0 0
    %545 = vmatprep.subr.bf16.mxu0 0
    %546 = vmatpush1.bf16.msra.mxu0 0
    %547 = vmatprep.subr.bf16.mxu0 0
    %548 = vmatpush1.bf16.msra.mxu0 0
    %549 = vmatprep.subr.bf16.mxu0 0
    %550 = vmatpush1.bf16.msra.mxu0 0
    %551 = vmatprep.subr.bf16.mxu0 0
    %552 = vmatpush1.bf16.msra.mxu0 0
    %553 = vmatprep.mubr.bf16.mxu0 0
    %554 = vmatmul.mubr.bf16.gmra.mrb[0].mxu0 %v455
    %v555 = vpop.f32.mrb[0].mxu0
    %v556 = vadd.f32 0.0, %v555
    %v557 = vpop.f32.mrb[0].mxu0
    %v558 = vpop.f32.mrb[0].mxu0
    %v559 = vpop.f32.mrb[0].mxu0
    %560 = vdwg.mxu0
    %v561 = vmax.f32 %v556, 0.0
    %v562 = vlaneseq
    %v563 = vand.u32 %v562, 127
    %vm564 = vcmp.lt.s32.totalorder %v563, 10
    %v565 = vsel %vm564, %v561, -inf
    %566 = vmax.xlane.f32.xlu0 %v565
    %v567 = vpop.xlane.xlu0 %566
    %v568 = vsub.f32 %v561, %v567
    %v569 = vmul.f32 %v568, 1.442695
    %v570 = vpow.pop %v569
    %v571 = vsel %vm564, %v570, 0.0
    %572 = vadd.xlane.f32.xlu0 %v571
    %v573 = vpop.xlane.xlu0 %572
    %v574 = vlog2.pop %v573
    %v575 = vmul.f32 %v574, 0.6931472
    %v576 = vadd.f32 %v575, %v567
    %v577 = vsub.f32 %v561, %v576
    %578 = vst [vmem:[#allocation5] sm:$0xff] %v577
    // Predicated region
    $region14: #{small_forward.1} parent=1 // pred_check
      _
    $region15: #{small_forward.1} parent=1 // pred_check_branch
      %580 = sbr.rel (0) target = $region17
    $region16: #{small_forward.1} parent=1 // pred_region
      %s582 = ssub.s32 128, 128
      %583 = vsyncadd [#allocation4], %s582
      %s585 = sshll.u32 [#allocation5], 4
      %s586 = int_to_ptr.vmem [resolvable:$true] %s585
      %588 = dma.vmem_to_hbm [thread:$0]  %s586, 128, %s2, [#allocation4]
    $region17: #{small_forward.1} parent=1 // pred_fallthru
      _
    // Predicated region
    $region18: #{small_forward.1} parent=1 // pred_check
      _
    $region19: #{small_forward.1} parent=1 // pred_check_branch
      %590 = sbr.rel (0) target = $region21
    $region20: #{small_forward.1} parent=1 // pred_region
      %591 = dma.done [#allocation4], 128
    $region21: #{small_forward.1} parent=1 // pred_fallthru
      _
    %592 = vsyncpa [#allocation3], 1
    %593 = vsyncpa [#allocation4], 1

</llo_original>
